<compile_context>
chip_gen: v5e
topology: v5e:2x2
jax: 0.10.0
libtpu: 0.0.40
codegen_flags: <defaults>
</compile_context>

<pallas_src>
import functools

import jax
import jax.numpy as jnp
from jax.experimental import pallas as pl
from jax.experimental.pallas import tpu as pltpu


def _round_up(n, m):
    return ((n + m - 1) // m) * m


def _pad_axis(a, target, axis):
    pad = target - a.shape[axis]
    if pad == 0:
        return a
    widths = [(0, 0)] * a.ndim
    widths[axis] = (0, pad)
    return jnp.pad(a, widths)


# ----------------------------------------------------------------------------
# Pallas kernels
# ----------------------------------------------------------------------------
def _proj_kernel(x_ref, w_ref, b_ref, o_ref):
    # x: (M, K) f32, w: (K, tn) bf16, b: (1, tn) f32 -> o: (M, tn) f32
    o_ref[...] = (jnp.dot(x_ref[...].astype(jnp.bfloat16), w_ref[...],
                          preferred_element_type=jnp.float32)
                  + b_ref[...])


def proj_matmul(x2d, w_bf16, b):
    """X @ W + b, tiled lane-dense over the output dim.  W is bf16, acc f32."""
    M, K = x2d.shape
    Kw, N = w_bf16.shape
    assert Kw == K and N % 128 == 0 and M % 8 == 0
    tn = 512 if N % 512 == 0 else (256 if N % 256 == 0 else 128)
    tn = min(tn, N)
    return pl.pallas_call(
        _proj_kernel,
        out_shape=jax.ShapeDtypeStruct((M, N), jnp.float32),
        grid_spec=pltpu.PrefetchScalarGridSpec(
            num_scalar_prefetch=0,
            grid=(N // tn,),
            in_specs=[pl.BlockSpec((M, K), lambda j: (0, 0)),
                      pl.BlockSpec((K, tn), lambda j: (0, j)),
                      pl.BlockSpec((1, tn), lambda j: (0, j))],
            out_specs=pl.BlockSpec((M, tn), lambda j: (0, j)),
        ),
        compiler_params=pltpu.CompilerParams(
            dimension_semantics=("parallel",)),
    )(x2d, w_bf16, b)


def _gen_kernel(x_ref, w_ref, b_ref, o_ref):
    # x: (M, H) f32, w: (tv, H) bf16 (tied embedding rows), b: (1, tv) f32
    o_ref[...] = (jax.lax.dot_general(
        x_ref[...].astype(jnp.bfloat16), w_ref[...],
        dimension_numbers=(((1,), (1,)), ((), ())),
        preferred_element_type=jnp.float32) + b_ref[...])


def generator(x2d, w_vh_bf16, b):
    """Tied generator: x @ W^T + b.  W stays in (V, H) layout (no host transpose)."""
    M, K = x2d.shape
    Vp, Kw = w_vh_bf16.shape
    assert Kw == K and Vp % 128 == 0 and M % 8 == 0
    tv = 512 if Vp % 512 == 0 else (256 if Vp % 256 == 0 else 128)
    tv = min(tv, Vp)
    return pl.pallas_call(
        _gen_kernel,
        out_shape=jax.ShapeDtypeStruct((M, Vp), jnp.float32),
        grid_spec=pltpu.PrefetchScalarGridSpec(
            num_scalar_prefetch=0,
            grid=(Vp // tv,),
            in_specs=[pl.BlockSpec((M, K), lambda j: (0, 0)),
                      pl.BlockSpec((tv, K), lambda j: (j, 0)),
                      pl.BlockSpec((1, tv), lambda j: (0, j))],
            out_specs=pl.BlockSpec((M, tv), lambda j: (0, j)),
        ),
        compiler_params=pltpu.CompilerParams(
            dimension_semantics=("parallel",)),
    )(x2d, w_vh_bf16, b)


def _lstm_chunk_kernel(gx_ref, m_ref, whh_ref, h0_ref, c0_ref,
                       out_ref, hN_ref, cN_ref, h_sc, c_sc, *, chunk, reverse):
    """One grid step == one time CHUNK; in-kernel fori_loop over the steps.

    gx_ref:  (chunk, B, 4H) precomputed x@W_ih + b (input projection hoisted)
    m_ref:   (chunk, B, 1)  1.0 valid / 0.0 padding (pack_padded semantics)
    whh_ref: (H, 4H) bf16
    """
    c_idx = pl.program_id(0)

    @pl.when(c_idx == 0)
    def _():
        h_sc[...] = h0_ref[...]
        c_sc[...] = c0_ref[...]

    H = h_sc.shape[-1]
    w_hh = whh_ref[...]  # hoisted out of the time loop

    def step(it, carry):
        s = (chunk - 1 - it) if reverse else it
        gx = gx_ref[s]                                   # (B, 4H) f32
        m = m_ref[s]                                     # (B, 1)  f32
        gates = gx + jnp.dot(h_sc[...].astype(jnp.bfloat16), w_hh,
                             preferred_element_type=jnp.float32)
        i_g = jax.nn.sigmoid(gates[:, 0 * H:1 * H])
        f_g = jax.nn.sigmoid(gates[:, 1 * H:2 * H])
        g_g = jnp.tanh(gates[:, 2 * H:3 * H])
        o_g = jax.nn.sigmoid(gates[:, 3 * H:4 * H])
        c_new = f_g * c_sc[...] + i_g * g_g
        h_new = o_g * jnp.tanh(c_new)
        # padded steps keep previous state and emit zeros in the output
        h_sc[...] = m * h_new + (1.0 - m) * h_sc[...]
        c_sc[...] = m * c_new + (1.0 - m) * c_sc[...]
        out_ref[s] = (m * h_new).astype(out_ref.dtype)
        return carry

    jax.lax.fori_loop(0, chunk, step, 0, unroll=(chunk <= 16))

    @pl.when(c_idx == pl.num_programs(0) - 1)
    def _():
        hN_ref[...] = h_sc[...]
        cN_ref[...] = c_sc[...]


def lstm_rec(gx, mask, w_hh_bf16, h0, c0, *, reverse=False):
    """LSTM recurrence over precomputed input gates, chunked over time.

    gx: (Sp, B, 4H) f32, mask: (Sp, B, 1) f32, w_hh: (H, 4H) bf16, h0/c0: (B, H) f32.
    If reverse=True the recurrence runs time-backwards (no reversed copies of
    the inputs are materialized); outputs are stored at their true time index.
    """
    Sp, Bp, G = gx.shape
    H = w_hh_bf16.shape[0]
    assert G == 4 * H and Bp % 8 == 0
    chunk = Sp if Sp <= 32 else 32
    assert Sp % chunk == 0
    C = Sp // chunk
    if reverse:
        t_map = lambda c: (C - 1 - c, 0, 0)
    else:
        t_map = lambda c: (c, 0, 0)
    kernel = functools.partial(_lstm_chunk_kernel, chunk=chunk, reverse=reverse)
    return pl.pallas_call(
        kernel,
        out_shape=(jax.ShapeDtypeStruct((Sp, Bp, H), jnp.float32),
                   jax.ShapeDtypeStruct((Bp, H), jnp.float32),
                   jax.ShapeDtypeStruct((Bp, H), jnp.float32)),
        grid_spec=pltpu.PrefetchScalarGridSpec(
            num_scalar_prefetch=0,
            grid=(C,),
            in_specs=[
                pl.BlockSpec((chunk, Bp, 4 * H), t_map),
                pl.BlockSpec((chunk, Bp, 1), t_map),
                pl.BlockSpec((H, 4 * H), lambda c: (0, 0)),
                pl.BlockSpec((Bp, H), lambda c: (0, 0)),
                pl.BlockSpec((Bp, H), lambda c: (0, 0)),
            ],
            out_specs=[
                pl.BlockSpec((chunk, Bp, H), t_map),
                pl.BlockSpec((Bp, H), lambda c: (0, 0)),
                pl.BlockSpec((Bp, H), lambda c: (0, 0)),
            ],
            scratch_shapes=[pltpu.VMEM((Bp, H), jnp.float32),
                            pltpu.VMEM((Bp, H), jnp.float32)],
        ),
        compiler_params=pltpu.CompilerParams(
            dimension_semantics=("arbitrary",)),
    )(gx, mask, w_hh_bf16, h0, c0)


# ----------------------------------------------------------------------------
# Parameters (deterministic, synthetic)
# ----------------------------------------------------------------------------
def init_params(key, src_vocab, tgt_vocab, hidden, padding_idx=0):
    assert hidden % 32 == 0  # keeps 4*hidden (and 8*Hd) a multiple of 128
    Hd = hidden // 2
    ks = jax.random.split(key, 12)
    scale = 0.1

    def nrm(k, shape):
        return scale * jax.random.normal(k, shape, dtype=jnp.float32)

    enc_emb = nrm(ks[0], (src_vocab, hidden)).at[padding_idx].set(0.0)
    dec_emb = nrm(ks[1], (tgt_vocab, hidden)).at[padding_idx].set(0.0)

    enc_wih_f = nrm(ks[2], (hidden, 4 * Hd))
    enc_whh_f = nrm(ks[3], (Hd, 4 * Hd))
    enc_b_f = nrm(ks[4], (1, 4 * Hd))
    enc_wih_b = nrm(ks[5], (hidden, 4 * Hd))
    enc_whh_b = nrm(ks[6], (Hd, 4 * Hd))
    enc_b_b = nrm(ks[7], (1, 4 * Hd))
    dec_wih = nrm(ks[8], (hidden, 4 * hidden))
    dec_whh = nrm(ks[9], (hidden, 4 * hidden))
    dec_b = nrm(ks[10], (1, 4 * hidden))
    gen_b = nrm(ks[11], (1, tgt_vocab))

    Vp = _round_up(tgt_vocab, 128)
    return dict(
        enc_emb=enc_emb,
        dec_emb=dec_emb,                                           # lookup table (f32)
        # fused fwd+bwd encoder input projection (bf16 weights, f32 bias)
        enc_wih_fb=jnp.concatenate([enc_wih_f, enc_wih_b], axis=1).astype(jnp.bfloat16),
        enc_b_fb=jnp.concatenate([enc_b_f, enc_b_b], axis=1),
        enc_whh_f=enc_whh_f.astype(jnp.bfloat16),
        enc_whh_b=enc_whh_b.astype(jnp.bfloat16),
        dec_wih=dec_wih.astype(jnp.bfloat16),
        dec_whh=dec_whh.astype(jnp.bfloat16),
        dec_b=dec_b,
        # tied generator weight: cached, vocab-padded, bf16, kept in (V, H) layout
        gen_w_pad=_pad_axis(dec_emb, Vp, 0).astype(jnp.bfloat16),
        gen_b_pad=_pad_axis(gen_b, Vp, 1),
    )


# ----------------------------------------------------------------------------
# Seq2Seq forward
# ----------------------------------------------------------------------------
def seq2seq_forward(params, src, src_lengths, tgt, dec_hidden=None):
    """src: (B, S) int32, src_lengths: (B,) int32, tgt: (B, T) int32."""
    B, S = src.shape
    H = params["enc_emb"].shape[1]
    Hd = params["enc_whh_f"].shape[0]
    V = params["dec_emb"].shape[0]

    Bp = _round_up(B, 8)                     # fill the 8 f32 sublanes
    chunk_e = S if S <= 32 else 32
    Sp = _round_up(S, chunk_e)

    # ---------------- Encoder ----------------
    src_emb = jnp.take(params["enc_emb"], src, axis=0)          # (B, S, H)
    x = jnp.transpose(src_emb, (1, 0, 2)).astype(jnp.float32)   # (S, B, H)
    x = _pad_axis(_pad_axis(x, Sp, 0), Bp, 1)                   # (Sp, Bp, H)

    len_p = _pad_axis(src_lengths.astype(jnp.int32), Bp, 0)
    mask = (jnp.arange(Sp)[:, None] < len_p[None, :]).astype(jnp.float32)[:, :, None]

    # hoisted input projection for BOTH directions in one MXU matmul
    gx_fb = proj_matmul(x.reshape(Sp * Bp, H), params["enc_wih_fb"], params["enc_b_fb"])
    gx_fb = gx_fb.reshape(Sp, Bp, 8 * Hd)
    gx_f, gx_b = gx_fb[..., :4 * Hd], gx_fb[..., 4 * Hd:]

    zeros_d = jnp.zeros((Bp, Hd), jnp.float32)
    out_f, hN_f, cN_f = lstm_rec(gx_f, mask, params["enc_whh_f"], zeros_d, zeros_d,
                                 reverse=False)
    out_b, hN_b, cN_b = lstm_rec(gx_b, mask, params["enc_whh_b"], zeros_d, zeros_d,
                                 reverse=True)

    encoder_outputs = jnp.concatenate([out_f, out_b], axis=-1)[:S, :B]  # unused (attn=None)
    del encoder_outputs
    final_h = jnp.concatenate([hN_f, hN_b], axis=-1)            # (Bp, H)
    final_c = jnp.concatenate([cN_f, cN_b], axis=-1)

    if dec_hidden is None:
        h0_d, c0_d = final_h, final_c                           # reshape_state semantics
    else:
        h0_d = _pad_axis(dec_hidden[0].astype(jnp.float32), Bp, 0)
        c0_d = _pad_axis(dec_hidden[1].astype(jnp.float32), Bp, 0)

    # ---------------- Decoder ----------------
    tgt_in = tgt[:, :-1]
    T1 = tgt_in.shape[1]
    chunk_d = T1 if T1 <= 32 else 32
    Tp = _round_up(T1, chunk_d)

    tgt_emb = jnp.take(params["dec_emb"], tgt_in, axis=0)       # (B, T1, H)
    y = jnp.transpose(tgt_emb, (1, 0, 2)).astype(jnp.float32)   # (T1, B, H)
    y = _pad_axis(_pad_axis(y, Tp, 0), Bp, 1)                   # (Tp, Bp, H)
    mask_d = jnp.broadcast_to(
        (jnp.arange(Tp) < T1).astype(jnp.float32)[:, None, None], (Tp, Bp, 1))

    gx_d = proj_matmul(y.reshape(Tp * Bp, H), params["dec_wih"], params["dec_b"])
    gx_d = gx_d.reshape(Tp, Bp, 4 * H)

    dec_out, dec_h, dec_c = lstm_rec(gx_d, mask_d, params["dec_whh"], h0_d, c0_d,
                                     reverse=False)

    # ---------------- Generator (tied weights) ----------------
    flat = jnp.transpose(dec_out[:T1, :B], (1, 0, 2)).reshape(B * T1, H)
    Nr = _round_up(B * T1, 8)
    flat = _pad_axis(flat, Nr, 0)
    logits_p = generator(flat, params["gen_w_pad"], params["gen_b_pad"])
    logits = logits_p[:B * T1, :V].reshape(B, T1, V)

    return logits, (dec_h[:B], dec_c[:B])


# ----------------------------------------------------------------------------
if __name__ == "__main__":
    key = jax.random.PRNGKey(0)
    kp, ksrc, ktgt = jax.random.split(key, 3)

    B = 2            # batch
    S = 8            # src seq len
    T = 7            # tgt seq len (decoder consumes tgt[:, :-1] -> 6 steps)
    H = 32           # hidden size (encoder uses H//2 per direction)
    V_SRC = 11
    V_TGT = 13
    PAD = 0

    params = init_params(kp, V_SRC, V_TGT, H, padding_idx=PAD)

    src_lengths = jnp.array([8, 5], dtype=jnp.int32)
    src = jax.random.randint(ksrc, (B, S), 1, V_SRC, dtype=jnp.int32)
    src = jnp.where(jnp.arange(S)[None, :] < src_lengths[:, None], src, PAD)
    tgt = jax.random.randint(ktgt, (B, T), 1, V_TGT, dtype=jnp.int32)

    logits, (dec_h, dec_c) = seq2seq_forward(params, src, src_lengths, tgt)
    jax.block_until_ready((logits, dec_h, dec_c))

    assert logits.shape == (B, T - 1, V_TGT), logits.shape
    assert dec_h.shape == (B, H) and dec_c.shape == (B, H)
    print("KERNEL_OK")
</pallas_src>

<mosaic_0001>
module attributes {stable_mosaic.version = 11 : i64} {
  func.func @_proj_kernel(%arg0: i32, %arg1: memref<64x32xf32, #tpu.memory_space<vmem>>, %arg2: memref<32x128xbf16, #tpu.memory_space<vmem>>, %arg3: memref<1x128xf32, #tpu.memory_space<vmem>>, %arg4: memref<64x128xf32, #tpu.memory_space<vmem>>) attributes {dimension_semantics = [#tpu.dimension_semantics<parallel>], iteration_bounds = array<i64: 1>, scalar_prefetch = 0 : i64, scratch_operands = 0 : i64, tpu.core_type = #tpu.core_type<tc>, window_params = [{pipeline_mode = #tpu.pipeline_mode<synchronous>, transform_indices = @transform_0, window_bounds = array<i64: 64, 32>}, {transform_indices = @transform_1, window_bounds = array<i64: 32, 128>}, {transform_indices = @transform_2, window_bounds = array<i64: 1, 128>}, {transform_indices = @transform_3, window_bounds = array<i64: 64, 128>}]} {
    %c0 = arith.constant 0 : index
    %c0_0 = arith.constant 0 : index
    %0 = vector.load %arg1[%c0, %c0_0] : memref<64x32xf32, #tpu.memory_space<vmem>>, vector<64x32xf32>
    %1 = arith.truncf %0 : vector<64x32xf32> to vector<64x32xbf16>
    %c0_1 = arith.constant 0 : index
    %c0_2 = arith.constant 0 : index
    %2 = vector.load %arg2[%c0_1, %c0_2] : memref<32x128xbf16, #tpu.memory_space<vmem>>, vector<32x128xbf16>
    %cst = arith.constant dense<0.000000e+00> : vector<64x128xf32>
    %3 = tpu.matmul %1, %2, %cst {dimension_numbers = #tpu.dot_dimension_numbers<[1], [0], [0], [1], [0, 0, 1, 1], [], []>} : vector<64x32xbf16>, vector<32x128xbf16>, vector<64x128xf32> -> vector<64x128xf32>
    %c0_3 = arith.constant 0 : index
    %c0_4 = arith.constant 0 : index
    %4 = vector.load %arg3[%c0_3, %c0_4] : memref<1x128xf32, #tpu.memory_space<vmem>>, vector<1x128xf32>
    %5 = vector.broadcast %4 : vector<1x128xf32> to vector<64x128xf32>
    %6 = arith.addf %3, %5 : vector<64x128xf32>
    %c0_5 = arith.constant 0 : index
    %c0_6 = arith.constant 0 : index
    %7 = vector.load %arg4[%c0_5, %c0_6] : memref<64x128xf32, #tpu.memory_space<vmem>>, vector<64x128xf32>
    tpu.vector_store %arg4[%c0_5, %c0_6], %6 {strides = array<i32>} : memref<64x128xf32, #tpu.memory_space<vmem>>, vector<64x128xf32>,
    return
  }
  func.func @transform_0(%arg0: i32) -> (i32, i32) {
    %c0_i32 = arith.constant 0 : i32
    %c0_i32_0 = arith.constant 0 : i32
    %c0_i32_1 = arith.constant 0 : i32
    return %c0_i32, %c0_i32_0 : i32, i32
  }
  func.func @transform_1(%arg0: i32) -> (i32, i32) {
    %c0_i32 = arith.constant 0 : i32
    %c0_i32_0 = arith.constant 0 : i32
    return %c0_i32, %arg0 : i32, i32
  }
  func.func @transform_2(%arg0: i32) -> (i32, i32) {
    %c0_i32 = arith.constant 0 : i32
    %c0_i32_0 = arith.constant 0 : i32
    return %c0_i32, %arg0 : i32, i32
  }
  func.func @transform_3(%arg0: i32) -> (i32, i32) {
    %c0_i32 = arith.constant 0 : i32
    %c0_i32_0 = arith.constant 0 : i32
    return %c0_i32, %arg0 : i32, i32
  }
}

</mosaic_0001>

<llo_original>
// kernel: tpu_custom_call.1
$region0: #{tpu_custom_call.1}
  #allocation0 [shape = 'u32[]', space=smem, size = 0x4, offset = 0x4, fixed_abs, tag = 'smem constant byte address 0x4 - core index']
  #allocation1 [shape = 'u32[72,128]{1,0:T(1,128)}', space=vmem, size = 0x9000, scoped, tag = 'internal scratch']
  %s0 = inlined_call_operand.vmem [shape: f32[64,32], index: 0, kind: input, shape index: {}]
  %s1 = inlined_call_operand.vmem [shape: bf16[32,128], index: 1, kind: input, shape index: {}]
  %s2 = inlined_call_operand.vmem [shape: f32[1,128], index: 2, kind: input, shape index: {}]
  %s3 = inlined_call_operand.hbm [shape: f32[64,128], index: 3, kind: output, shape index: {}]
  %s4 = sld [smem:[#allocation0]]
  $region22: #{tpu_custom_call.1} parent=0
    _
  %s6 = ssub.s32 1, %s4
  %s7 = scalar_select 0, %s6, %s4
  $region1: #{tpu_custom_call.1} parent=0
    #allocation2 [shape = 'u8[32768]{0}', space=vmem, size = 0x8000, scoped, tag = 'output window, operand 0, single buffered']
    #allocation3 [shape = 's32[1]{0}', space=sflag, size = 0x4, scoped, tag = 'scoped memory for tpu_custom_call.1']
    %8 = vsyncpa [#allocation3], 0
    // Predicated region
    $region2: #{tpu_custom_call.1} parent=1 // pred_check
      _
    $region3: #{tpu_custom_call.1} parent=1 // pred_check_branch
      %10 = sbr.rel (0) target = $region5
    $region4: #{tpu_custom_call.1} parent=1 // pred_region
      _
    $region5: #{tpu_custom_call.1} parent=1 // pred_fallthru
      _
    // Predicated region
    $region6: #{tpu_custom_call.1} parent=1 // pred_check
      _
    $region7: #{tpu_custom_call.1} parent=1 // pred_check_branch
      %12 = sbr.rel (0) target = $region9
    $region8: #{tpu_custom_call.1} parent=1 // pred_region
      _
    $region9: #{tpu_custom_call.1} parent=1 // pred_fallthru
      _
    // Predicated region
    $region10: #{tpu_custom_call.1} parent=1 // pred_check
      _
    $region11: #{tpu_custom_call.1} parent=1 // pred_check_branch
      %14 = sbr.rel (0) target = $region13
    $region12: #{tpu_custom_call.1} parent=1 // pred_region
      _
    $region13: #{tpu_custom_call.1} parent=1 // pred_fallthru
      _
    %v16 = vld [vmem:[%s0] sm:$0xff]
    %v17 = vld [vmem:[%s0 + $0x8] sm:$0xff]
    %v18 = vld [vmem:[%s0 + $0x10] sm:$0xff]
    %v19 = vld [vmem:[%s0 + $0x18] sm:$0xff]
    %v20 = vld [vmem:[%s0 + $0x20] sm:$0xff]
    %v21 = vld [vmem:[%s0 + $0x28] sm:$0xff]
    %v22 = vld [vmem:[%s0 + $0x30] sm:$0xff]
    %v23 = vld [vmem:[%s0 + $0x38] sm:$0xff]
    %v24 = vpack.c.bf16 %v17, %v16
    %v25 = vpack.c.bf16 %v19, %v18
    %v26 = vpack.c.bf16 %v21, %v20
    %v27 = vpack.c.bf16 %v23, %v22
    %v28 = vld [vmem:[%s1] sm:$0xf]
    %v29 = vld [vmem:[%s1 + $0x4] sm:$0xf]
    %v30 = vld [vmem:[%s1 + $0x8] sm:$0xf]
    %v31 = vld [vmem:[%s1 + $0xc] sm:$0xf]
    %v32 = vld [vmem:[%s2] sm:$0x1]
    %v34 = vperm.slane %v32, 0
    %v40 = vunpack.c.l.b16 %v28
    %v41 = vunpack.c.l.b16 %v29
    %v42 = vunpack.c.l.b16 %v30
    %v43 = vunpack.c.l.b16 %v31
    %v44 = vpack.c.b16 %v41, %v40
    %v45 = vpack.c.b16 %v43, %v42
    %vm48 = vcmask 261120
    %v50 = vsel %vm48, %v24, 0
    %v53 = vsel %vm48, %v25, 0
    %v56 = vsel %vm48, %v26, 0
    %v59 = vsel %vm48, %v27, 0
    %61 = vmatpush.bf16.msra.mxu0 0
    %62 = vmatpush.bf16.msra.mxu0 0
    %63 = vmatpush.bf16.msra.mxu0 0
    %64 = vmatpush.bf16.msra.mxu0 0
    %65 = vmatpush.bf16.msra.mxu0 0
    %66 = vmatpush.bf16.msra.mxu0 0
    %67 = vmatpush.bf16.msra.mxu0 %v45
    %68 = vmatpush.bf16.msra.mxu0 %v44
    %69 = vmatmul.bf16.gmra.mxu0 %v50
    %v70 = vpop.f32.mrf.mxu0
    %v71 = vadd.f32 %v34, %v70
    %v72 = vpop.f32.mrf.mxu0
    %v73 = vadd.f32 %v34, %v72
    %74 = vmatmul.bf16.gmra.mxu0 %v53
    %v75 = vpop.f32.mrf.mxu0
    %v76 = vadd.f32 %v34, %v75
    %v77 = vpop.f32.mrf.mxu0
    %v78 = vadd.f32 %v34, %v77
    %79 = vmatmul.bf16.gmra.mxu0 %v56
    %v80 = vpop.f32.mrf.mxu0
    %v81 = vadd.f32 %v34, %v80
    %v82 = vpop.f32.mrf.mxu0
    %v83 = vadd.f32 %v34, %v82
    %84 = vmatmul.bf16.gmra.mxu0 %v59
    %v85 = vpop.f32.mrf.mxu0
    %v86 = vadd.f32 %v34, %v85
    %v87 = vpop.f32.mrf.mxu0
    %v88 = vadd.f32 %v34, %v87
    %89 = vdwg.mxu0
    %90 = vst [vmem:[#allocation2] sm:$0xff] %v71
    %91 = vst [vmem:[#allocation2 + $0x8] sm:$0xff] %v73
    %92 = vst [vmem:[#allocation2 + $0x10] sm:$0xff] %v76
    %93 = vst [vmem:[#allocation2 + $0x18] sm:$0xff] %v78
    %94 = vst [vmem:[#allocation2 + $0x20] sm:$0xff] %v81
    %95 = vst [vmem:[#allocation2 + $0x28] sm:$0xff] %v83
    %96 = vst [vmem:[#allocation2 + $0x30] sm:$0xff] %v86
    %97 = vst [vmem:[#allocation2 + $0x38] sm:$0xff] %v88
    // Predicated region
    $region14: #{tpu_custom_call.1} parent=1 // pred_check
      _
    $region15: #{tpu_custom_call.1} parent=1 // pred_check_branch
      %99 = sbr.rel (0) target = $region17
    $region16: #{tpu_custom_call.1} parent=1 // pred_region
      %101 = vsyncadd [#allocation3], 0
      %s102 = sshll.u32 [#allocation2], 4
      %s103 = int_to_ptr.vmem [resolvable:$true] %s102
      %s104 = sshll.u32 %s3, 4
      %s105 = int_to_ptr.hbm [resolvable:$true] %s104
      %110 = dma.vmem_to_hbm [thread:$0]  %s103, 1024, %s105, [#allocation3], 128, 128, 8
    $region17: #{tpu_custom_call.1} parent=1 // pred_fallthru
      _
    // Predicated region
    $region18: #{tpu_custom_call.1} parent=1 // pred_check
      _
    $region19: #{tpu_custom_call.1} parent=1 // pred_check_branch
      %112 = sbr.rel (0) target = $region21
    $region20: #{tpu_custom_call.1} parent=1 // pred_region
      %114 = dma.done [#allocation3], 1024
    $region21: #{tpu_custom_call.1} parent=1 // pred_fallthru
      _
    %115 = vsyncpa [#allocation3], 1

</llo_original>
